<compile_context>
chip_gen: v6e
topology: v6e:2x2x1
jax: 0.10.0
libtpu: 0.0.40
codegen_flags: <defaults>
</compile_context>

<pallas_src>
import numpy as np
import jax
import jax.numpy as jnp
from jax.experimental import pallas as pl
from jax.experimental.pallas import tpu as pltpu


# ----------------------------------------------------------------------------
# Fused kernel: quaternion -> rotation matrix  +  sum((alpha - gt)^2)
# ----------------------------------------------------------------------------
def _fused_kernel(quat_ref, img_ref, gt_ref, loss_ref, r_ref, acc_ref):
    j_step = pl.program_id(1)

    @pl.when(j_step == 0)
    def _init():
        acc_ref[...] = jnp.zeros_like(acc_ref)

        # --- quaternion normalization + quaternion -> rotation matrix (tiny,
        # once per chunk, fully hidden under the HBM-bound streaming loop).
        # The 9 matrix elements are scattered onto 9 lanes of a (1, 1, 9) row
        # (lane-only layout -> simplest/most robust Mosaic lowering). ---
        q = quat_ref[...]                                        # (1, 4) f32
        norm = jnp.sqrt(jnp.sum(q * q, axis=1, keepdims=True) + 1e-8)
        qn = q / norm
        two_s = 2.0 / jnp.sum(qn * qn, axis=1, keepdims=True)    # (1, 1)
        w = qn[:, 0:1]
        x = qn[:, 1:2]
        y = qn[:, 2:3]
        z = qn[:, 3:4]
        elems = (
            1.0 - two_s * (y * y + z * z), two_s * (x * y - z * w), two_s * (x * z + y * w),
            two_s * (x * y + z * w), 1.0 - two_s * (x * x + z * z), two_s * (y * z - x * w),
            two_s * (x * z - y * w), two_s * (y * z + x * w), 1.0 - two_s * (x * x + y * y),
        )
        lane = jax.lax.broadcasted_iota(jnp.int32, (1, 1, 9), 2)
        rflat = jnp.zeros((1, 1, 9), jnp.float32)
        for idx, val in enumerate(elems):                        # val: (1, 1)
            rflat = rflat + jnp.where(lane == idx, val, 0.0)
        r_ref[...] = rflat                                       # (1, 1, 9)

    # --- streaming squared-error accumulation (pure VPU in the hot loop) ---
    x_img = img_ref[...]                                   # (N, TH, 4W) f32 (RGBA interleaved)
    g = gt_ref[...].astype(jnp.float32)                    # (N, TH, 4W), alpha lanes hold gt
    lane = jax.lax.broadcasted_iota(jnp.int32, x_img.shape, dimension=2)
    is_alpha = (lane & 3) == 3                             # channel 3 of the RGBA interleave
    d = jnp.where(is_alpha, x_img - g, 0.0)
    acc_ref[...] += d * d                                  # no per-step XLU reduce

    @pl.when(j_step == pl.num_programs(1) - 1)
    def _finalize():
        # Single cross-lane/sublane reduction per chunk.
        loss_ref[...] = jnp.sum(acc_ref[...], keepdims=True)   # (1, 1, 1)


def _choose_tiling(n, h, wc, budget_bytes, max_rows_per_block=None):
    """Pick the largest H tile that keeps VMEM usage under `budget_bytes`.

    VMEM per image row held live:
      image block f32 (x2 pipeline buffers) + gt block bf16 (x2) + f32 accumulator.
    """
    per_row = n * wc * (2 * 4 + 2 * 2 + 4)
    cap = max(8, budget_bytes // max(per_row, 1))
    if max_rows_per_block is not None:
        cap = min(cap, max_rows_per_block)
    cands = [d for d in range(8, h + 1, 8) if h % d == 0 and d <= cap]
    if cands:
        th = max(cands)
    elif h % 8 == 0:
        th = 8
    else:
        th = h  # ragged H: single block (block == full array dims is legal).
    nblk = h // th
    n_outer = 2 if nblk % 2 == 0 and nblk >= 2 else 1   # 2 chunks -> both v7x TensorCores
    n_inner = nblk // n_outer
    return th, n_outer, n_inner


def silhouette_loss_and_rotmat(quat, image_lanes, gt_lanes, *,
                               max_rows_per_block=None,
                               vmem_budget_bytes=24 * 1024 * 1024):
    """quat (1,4) f32, image_lanes (N,H,4W) f32, gt_lanes (N,H,4W) bf16
    -> (scalar loss f32, R (1,3,3) f32)."""
    n, h, wc = image_lanes.shape
    th, n_outer, n_inner = _choose_tiling(n, h, wc, vmem_budget_bytes, max_rows_per_block)

    partials, r_all = pl.pallas_call(
        _fused_kernel,
        out_shape=(
            jax.ShapeDtypeStruct((n_outer, 1, 1), jnp.float32),
            jax.ShapeDtypeStruct((n_outer, 1, 9), jnp.float32),
        ),
        grid=(n_outer, n_inner),
        in_specs=[
            pl.BlockSpec((1, 4), lambda i, j: (0, 0)),
            pl.BlockSpec((n, th, wc), lambda i, j: (0, i * n_inner + j, 0)),
            pl.BlockSpec((n, th, wc), lambda i, j: (0, i * n_inner + j, 0)),
        ],
        out_specs=(
            pl.BlockSpec((1, 1, 1), lambda i, j: (i, 0, 0)),
            pl.BlockSpec((1, 1, 9), lambda i, j: (i, 0, 0)),
        ),
        scratch_shapes=[pltpu.VMEM((n, th, wc), jnp.float32)],
        compiler_params=pltpu.CompilerParams(
            dimension_semantics=("parallel", "arbitrary"),
            vmem_limit_bytes=32 * 1024 * 1024,   # safe on v5e/v6e/v7x
        ),
    )(quat, image_lanes, gt_lanes)

    loss = jnp.sum(partials)                  # tiny reduction over per-chunk partials
    r = r_all[0, 0].reshape(1, 3, 3)          # every chunk writes an identical copy of R
    return loss, r


# ----------------------------------------------------------------------------
# Init glue (matches shapes produced by the PyTorch __init__)
# ----------------------------------------------------------------------------
def rodrigues_np(axis, angle):
    axis = np.asarray(axis, np.float64)
    axis = axis / np.linalg.norm(axis)
    K = np.array([[0.0, -axis[2], axis[1]],
                  [axis[2], 0.0, -axis[0]],
                  [-axis[1], axis[0], 0.0]])
    return np.eye(3) + np.sin(angle) * K + (1.0 - np.cos(angle)) * (K @ K)


def matrix_to_quaternion_np(R):
    # Trace-based conversion (well-conditioned for the rotations used here).
    R = np.asarray(R, np.float64).reshape(3, 3)
    w = 0.5 * np.sqrt(max(0.0, 1.0 + R[0, 0] + R[1, 1] + R[2, 2]))
    x = (R[2, 1] - R[1, 2]) / (4.0 * w)
    y = (R[0, 2] - R[2, 0]) / (4.0 * w)
    z = (R[1, 0] - R[0, 1]) / (4.0 * w)
    return np.array([[w, x, y, z]], dtype=np.float32)        # (1, 4)


class QuaternionModelPallas:
    """JAX/Pallas port of QuaternionModel.

    The mesh renderer itself is not translatable to Pallas, so forward()
    takes the rendered RGBA image (N, H, W, 4) as an argument.
    """

    def __init__(self, gt_image, R_init, T_init):
        mask = (np.asarray(gt_image) != 0).astype(np.float32)
        if mask.ndim == 2:
            mask = mask[None]
        n, h, w = mask.shape
        self.gt_image = jnp.asarray(mask)                        # buffer (f32, parity)
        # Pre-expanded, channel-interleaved bf16 silhouette: gt values at lane
        # positions 4k+3 (the alpha channel), zeros elsewhere.  Built once; the
        # loss kernel streams this alongside the raw RGBA image (no XLA slice pass).
        gt_exp = np.zeros((n, h, w, 4), np.float32)
        gt_exp[..., 3] = mask
        self._gt_lanes = jnp.asarray(gt_exp.reshape(n, h, 4 * w), dtype=jnp.bfloat16)
        self.quat = jnp.asarray(matrix_to_quaternion_np(R_init))  # param (1, 4)
        self.T = jnp.asarray(T_init, jnp.float32)                 # param (1, 3)
        self.R = None

    def forward(self, image, *, max_rows_per_block=None):
        # TODO(synk): renderer(meshes_world=..., R=R, T=T) has no Pallas equivalent;
        # `image` stands in for its output.  R is computed inside the fused kernel.
        n, h, w, c = image.shape
        image_lanes = image.reshape(n, h, w * c)   # free row-major reshape (no HBM pass)
        loss, r = silhouette_loss_and_rotmat(
            self.quat, image_lanes, self._gt_lanes,
            max_rows_per_block=max_rows_per_block)
        self.R = r                                 # (1, 3, 3)
        return loss, image


# ----------------------------------------------------------------------------
# Pure-JAX reference for correctness check
# ----------------------------------------------------------------------------
def quat_to_rotmat_ref(q):
    qn = q / jnp.sqrt(jnp.sum(q * q) + 1e-8)
    r, i, j, k = qn[0, 0], qn[0, 1], qn[0, 2], qn[0, 3]
    two_s = 2.0 / jnp.sum(qn * qn)
    o = jnp.stack([
        1 - two_s * (j * j + k * k), two_s * (i * j - k * r), two_s * (i * k + j * r),
        two_s * (i * j + k * r), 1 - two_s * (i * i + k * k), two_s * (j * k - i * r),
        two_s * (i * k - j * r), two_s * (j * k + i * r), 1 - two_s * (i * i + j * j),
    ])
    return o.reshape(1, 3, 3)


if __name__ == "__main__":
    key = jax.random.PRNGKey(0)
    k_gt, k_img, k_t = jax.random.split(key, 3)

    N, H, W = 1, 64, 32

    # "Ground-truth" image with zeros and non-zeros (mirrors (gt_image != 0)).
    u = jax.random.uniform(k_gt, (N, H, W))
    gt_raw = np.asarray(jnp.where(u > 0.5, u, 0.0))

    # Deterministic R_init / T_init.
    R_init = rodrigues_np([1.0, 2.0, 3.0], 0.3).astype(np.float32)
    T_init = jax.random.normal(k_t, (1, 3), dtype=jnp.float32)

    # Stand-in for the renderer output (N, H, W, 4), channels-last.
    image = jax.random.uniform(k_img, (N, H, W, 4), dtype=jnp.float32)

    model = QuaternionModelPallas(gt_raw, R_init, T_init)

    # Reference values.
    loss_ref = jnp.sum((image[..., 3] - model.gt_image) ** 2)
    R_ref = quat_to_rotmat_ref(model.quat)

    # Run 1: default (VMEM-budgeted) tiling -> single block for this small image.
    loss, image_out = model.forward(image)
    loss = jax.block_until_ready(loss)
    image_out = jax.block_until_ready(image_out)
    R = jax.block_until_ready(model.R)
    assert np.allclose(np.asarray(loss), np.asarray(loss_ref), rtol=1e-4, atol=1e-4)
    assert np.allclose(np.asarray(R), np.asarray(R_ref), rtol=1e-5, atol=1e-5)
    assert np.allclose(np.asarray(image_out), np.asarray(image), rtol=0, atol=0)

    # Run 2: force small tiles to exercise the (parallel, arbitrary) grid and the
    # in-VMEM accumulation / finalize path.
    loss2, _ = model.forward(image, max_rows_per_block=16)
    loss2 = jax.block_until_ready(loss2)
    R2 = jax.block_until_ready(model.R)
    assert np.allclose(np.asarray(loss2), np.asarray(loss_ref), rtol=1e-4, atol=1e-4)
    assert np.allclose(np.asarray(R2), np.asarray(R_ref), rtol=1e-5, atol=1e-5)

    print("KERNEL_OK")
</pallas_src>

<mosaic_0001>
module attributes {stable_mosaic.version = 11 : i64} {
  func.func @_fused_kernel(%arg0: i32, %arg1: i32, %arg2: memref<1x4xf32, #tpu.memory_space<vmem>>, %arg3: memref<1x64x128xf32, #tpu.memory_space<vmem>>, %arg4: memref<1x64x128xbf16, #tpu.memory_space<vmem>>, %arg5: memref<1x1x1xf32, #tpu.memory_space<vmem>>, %arg6: memref<1x1x9xf32, #tpu.memory_space<vmem>>, %arg7: memref<1x64x128xf32, #tpu.memory_space<vmem>>) attributes {dimension_semantics = [#tpu.dimension_semantics<parallel>, #tpu.dimension_semantics<arbitrary>], iteration_bounds = array<i64: 1, 1>, scalar_prefetch = 0 : i64, scratch_operands = 1 : i64, tpu.core_type = #tpu.core_type<tc>, window_params = [{pipeline_mode = #tpu.pipeline_mode<synchronous>, transform_indices = @transform_0, window_bounds = array<i64: 1, 4>}, {transform_indices = @transform_1, window_bounds = array<i64: 1, 64, 128>}, {transform_indices = @transform_2, window_bounds = array<i64: 1, 64, 128>}, {transform_indices = @transform_3, window_bounds = array<i64: 1, 1, 1>}, {transform_indices = @transform_4, window_bounds = array<i64: 1, 1, 9>}]} {
    %c0_i32 = arith.constant 0 : i32
    %0 = arith.cmpi eq, %arg1, %c0_i32 : i32
    %1 = arith.extui %0 : i1 to i32
    %c0_i32_0 = arith.constant 0 : i32
    %2 = arith.cmpi ne, %1, %c0_i32_0 : i32
    scf.if %2 {
      %cst_15 = arith.constant 0.000000e+00 : f32
      %21 = vector.broadcast %cst_15 : f32 to vector<1x64x128xf32>
      %c0_16 = arith.constant 0 : index
      %c0_17 = arith.constant 0 : index
      %c0_18 = arith.constant 0 : index
      %22 = vector.load %arg7[%c0_16, %c0_17, %c0_18] : memref<1x64x128xf32, #tpu.memory_space<vmem>>, vector<1x64x128xf32>
      tpu.vector_store %arg7[%c0_16, %c0_17, %c0_18], %21 {strides = array<i32>} : memref<1x64x128xf32, #tpu.memory_space<vmem>>, vector<1x64x128xf32>,
      %c0_19 = arith.constant 0 : index
      %c0_20 = arith.constant 0 : index
      %23 = vector.load %arg2[%c0_19, %c0_20] : memref<1x4xf32, #tpu.memory_space<vmem>>, vector<1x4xf32>
      %24 = arith.mulf %23, %23 : vector<1x4xf32>
      %cst_21 = arith.constant dense<0.000000e+00> : vector<1xf32>
      %25 = vector.multi_reduction <add>, %24, %cst_21 [1] : vector<1x4xf32> to vector<1xf32>
      %26 = vector.shape_cast %25 : vector<1xf32> to vector<1x1xf32>
      %cst_22 = arith.constant 9.99999993E-9 : f32
      %27 = vector.broadcast %cst_22 : f32 to vector<1x1xf32>
      %28 = arith.addf %26, %27 : vector<1x1xf32>
      %29 = math.sqrt %28 : vector<1x1xf32>
      %30 = vector.broadcast %29 : vector<1x1xf32> to vector<1x4xf32>
      %31 = arith.divf %23, %30 : vector<1x4xf32>
      %32 = arith.mulf %31, %31 : vector<1x4xf32>
      %cst_23 = arith.constant dense<0.000000e+00> : vector<1xf32>
      %33 = vector.multi_reduction <add>, %32, %cst_23 [1] : vector<1x4xf32> to vector<1xf32>
      %34 = vector.shape_cast %33 : vector<1xf32> to vector<1x1xf32>
      %cst_24 = arith.constant 2.000000e+00 : f32
      %35 = vector.broadcast %cst_24 : f32 to vector<1x1xf32>
      %36 = arith.divf %35, %34 : vector<1x1xf32>
      %37 = vector.extract_strided_slice %31 {offsets = [0, 0], sizes = [1, 1], strides = [1, 1]} : vector<1x4xf32> to vector<1x1xf32>
      %38 = vector.extract_strided_slice %31 {offsets = [0, 1], sizes = [1, 1], strides = [1, 1]} : vector<1x4xf32> to vector<1x1xf32>
      %39 = vector.extract_strided_slice %31 {offsets = [0, 2], sizes = [1, 1], strides = [1, 1]} : vector<1x4xf32> to vector<1x1xf32>
      %40 = vector.extract_strided_slice %31 {offsets = [0, 3], sizes = [1, 1], strides = [1, 1]} : vector<1x4xf32> to vector<1x1xf32>
      %41 = arith.mulf %39, %39 : vector<1x1xf32>
      %42 = arith.mulf %40, %40 : vector<1x1xf32>
      %43 = arith.addf %41, %42 : vector<1x1xf32>
      %44 = arith.mulf %36, %43 : vector<1x1xf32>
      %cst_25 = arith.constant 1.000000e+00 : f32
      %45 = vector.broadcast %cst_25 : f32 to vector<1x1xf32>
      %46 = arith.subf %45, %44 : vector<1x1xf32>
      %47 = arith.mulf %38, %39 : vector<1x1xf32>
      %48 = arith.mulf %40, %37 : vector<1x1xf32>
      %49 = arith.subf %47, %48 : vector<1x1xf32>
      %50 = arith.mulf %36, %49 : vector<1x1xf32>
      %51 = arith.mulf %38, %40 : vector<1x1xf32>
      %52 = arith.mulf %39, %37 : vector<1x1xf32>
      %53 = arith.addf %51, %52 : vector<1x1xf32>
      %54 = arith.mulf %36, %53 : vector<1x1xf32>
      %55 = arith.mulf %38, %39 : vector<1x1xf32>
      %56 = arith.mulf %40, %37 : vector<1x1xf32>
      %57 = arith.addf %55, %56 : vector<1x1xf32>
      %58 = arith.mulf %36, %57 : vector<1x1xf32>
      %59 = arith.mulf %38, %38 : vector<1x1xf32>
      %60 = arith.mulf %40, %40 : vector<1x1xf32>
      %61 = arith.addf %59, %60 : vector<1x1xf32>
      %62 = arith.mulf %36, %61 : vector<1x1xf32>
      %cst_26 = arith.constant 1.000000e+00 : f32
      %63 = vector.broadcast %cst_26 : f32 to vector<1x1xf32>
      %64 = arith.subf %63, %62 : vector<1x1xf32>
      %65 = arith.mulf %39, %40 : vector<1x1xf32>
      %66 = arith.mulf %38, %37 : vector<1x1xf32>
      %67 = arith.subf %65, %66 : vector<1x1xf32>
      %68 = arith.mulf %36, %67 : vector<1x1xf32>
      %69 = arith.mulf %38, %40 : vector<1x1xf32>
      %70 = arith.mulf %39, %37 : vector<1x1xf32>
      %71 = arith.subf %69, %70 : vector<1x1xf32>
      %72 = arith.mulf %36, %71 : vector<1x1xf32>
      %73 = arith.mulf %39, %40 : vector<1x1xf32>
      %74 = arith.mulf %38, %37 : vector<1x1xf32>
      %75 = arith.addf %73, %74 : vector<1x1xf32>
      %76 = arith.mulf %36, %75 : vector<1x1xf32>
      %77 = arith.mulf %38, %38 : vector<1x1xf32>
      %78 = arith.mulf %39, %39 : vector<1x1xf32>
      %79 = arith.addf %77, %78 : vector<1x1xf32>
      %80 = arith.mulf %36, %79 : vector<1x1xf32>
      %cst_27 = arith.constant 1.000000e+00 : f32
      %81 = vector.broadcast %cst_27 : f32 to vector<1x1xf32>
      %82 = arith.subf %81, %80 : vector<1x1xf32>
      %83 = tpu.iota {dimensions = array<i32: 2>} : vector<1x1x9xi32>
      %cst_28 = arith.constant 0.000000e+00 : f32
      %84 = vector.broadcast %cst_28 : f32 to vector<1x1x9xf32>
      %c0_i32_29 = arith.constant 0 : i32
      %85 = vector.broadcast %c0_i32_29 : i32 to vector<1x1x9xi32>
      %86 = arith.cmpi eq, %83, %85 : vector<1x1x9xi32>
      %cst_30 = arith.constant 0.000000e+00 : f32
      %87 = vector.shape_cast %46 : vector<1x1xf32> to vector<1x1x1xf32>
      %88 = vector.broadcast %87 : vector<1x1x1xf32> to vector<1x1x9xf32>
      %89 = vector.broadcast %cst_30 : f32 to vector<1x1x9xf32>
      %90 = arith.select %86, %88, %89 : vector<1x1x9xi1>, vector<1x1x9xf32>
      %91 = arith.addf %84, %90 : vector<1x1x9xf32>
      %c1_i32 = arith.constant 1 : i32
      %92 = vector.broadcast %c1_i32 : i32 to vector<1x1x9xi32>
      %93 = arith.cmpi eq, %83, %92 : vector<1x1x9xi32>
      %cst_31 = arith.constant 0.000000e+00 : f32
      %94 = vector.shape_cast %50 : vector<1x1xf32> to vector<1x1x1xf32>
      %95 = vector.broadcast %94 : vector<1x1x1xf32> to vector<1x1x9xf32>
      %96 = vector.broadcast %cst_31 : f32 to vector<1x1x9xf32>
      %97 = arith.select %93, %95, %96 : vector<1x1x9xi1>, vector<1x1x9xf32>
      %98 = arith.addf %91, %97 : vector<1x1x9xf32>
      %c2_i32 = arith.constant 2 : i32
      %99 = vector.broadcast %c2_i32 : i32 to vector<1x1x9xi32>
      %100 = arith.cmpi eq, %83, %99 : vector<1x1x9xi32>
      %cst_32 = arith.constant 0.000000e+00 : f32
      %101 = vector.shape_cast %54 : vector<1x1xf32> to vector<1x1x1xf32>
      %102 = vector.broadcast %101 : vector<1x1x1xf32> to vector<1x1x9xf32>
      %103 = vector.broadcast %cst_32 : f32 to vector<1x1x9xf32>
      %104 = arith.select %100, %102, %103 : vector<1x1x9xi1>, vector<1x1x9xf32>
      %105 = arith.addf %98, %104 : vector<1x1x9xf32>
      %c3_i32_33 = arith.constant 3 : i32
      %106 = vector.broadcast %c3_i32_33 : i32 to vector<1x1x9xi32>
      %107 = arith.cmpi eq, %83, %106 : vector<1x1x9xi32>
      %cst_34 = arith.constant 0.000000e+00 : f32
      %108 = vector.shape_cast %58 : vector<1x1xf32> to vector<1x1x1xf32>
      %109 = vector.broadcast %108 : vector<1x1x1xf32> to vector<1x1x9xf32>
      %110 = vector.broadcast %cst_34 : f32 to vector<1x1x9xf32>
      %111 = arith.select %107, %109, %110 : vector<1x1x9xi1>, vector<1x1x9xf32>
      %112 = arith.addf %105, %111 : vector<1x1x9xf32>
      %c4_i32 = arith.constant 4 : i32
      %113 = vector.broadcast %c4_i32 : i32 to vector<1x1x9xi32>
      %114 = arith.cmpi eq, %83, %113 : vector<1x1x9xi32>
      %cst_35 = arith.constant 0.000000e+00 : f32
      %115 = vector.shape_cast %64 : vector<1x1xf32> to vector<1x1x1xf32>
      %116 = vector.broadcast %115 : vector<1x1x1xf32> to vector<1x1x9xf32>
      %117 = vector.broadcast %cst_35 : f32 to vector<1x1x9xf32>
      %118 = arith.select %114, %116, %117 : vector<1x1x9xi1>, vector<1x1x9xf32>
      %119 = arith.addf %112, %118 : vector<1x1x9xf32>
      %c5_i32 = arith.constant 5 : i32
      %120 = vector.broadcast %c5_i32 : i32 to vector<1x1x9xi32>
      %121 = arith.cmpi eq, %83, %120 : vector<1x1x9xi32>
      %cst_36 = arith.constant 0.000000e+00 : f32
      %122 = vector.shape_cast %68 : vector<1x1xf32> to vector<1x1x1xf32>
      %123 = vector.broadcast %122 : vector<1x1x1xf32> to vector<1x1x9xf32>
      %124 = vector.broadcast %cst_36 : f32 to vector<1x1x9xf32>
      %125 = arith.select %121, %123, %124 : vector<1x1x9xi1>, vector<1x1x9xf32>
      %126 = arith.addf %119, %125 : vector<1x1x9xf32>
      %c6_i32 = arith.constant 6 : i32
      %127 = vector.broadcast %c6_i32 : i32 to vector<1x1x9xi32>
      %128 = arith.cmpi eq, %83, %127 : vector<1x1x9xi32>
      %cst_37 = arith.constant 0.000000e+00 : f32
      %129 = vector.shape_cast %72 : vector<1x1xf32> to vector<1x1x1xf32>
      %130 = vector.broadcast %129 : vector<1x1x1xf32> to vector<1x1x9xf32>
      %131 = vector.broadcast %cst_37 : f32 to vector<1x1x9xf32>
      %132 = arith.select %128, %130, %131 : vector<1x1x9xi1>, vector<1x1x9xf32>
      %133 = arith.addf %126, %132 : vector<1x1x9xf32>
      %c7_i32 = arith.constant 7 : i32
      %134 = vector.broadcast %c7_i32 : i32 to vector<1x1x9xi32>
      %135 = arith.cmpi eq, %83, %134 : vector<1x1x9xi32>
      %cst_38 = arith.constant 0.000000e+00 : f32
      %136 = vector.shape_cast %76 : vector<1x1xf32> to vector<1x1x1xf32>
      %137 = vector.broadcast %136 : vector<1x1x1xf32> to vector<1x1x9xf32>
      %138 = vector.broadcast %cst_38 : f32 to vector<1x1x9xf32>
      %139 = arith.select %135, %137, %138 : vector<1x1x9xi1>, vector<1x1x9xf32>
      %140 = arith.addf %133, %139 : vector<1x1x9xf32>
      %c8_i32 = arith.constant 8 : i32
      %141 = vector.broadcast %c8_i32 : i32 to vector<1x1x9xi32>
      %142 = arith.cmpi eq, %83, %141 : vector<1x1x9xi32>
      %cst_39 = arith.constant 0.000000e+00 : f32
      %143 = vector.shape_cast %82 : vector<1x1xf32> to vector<1x1x1xf32>
      %144 = vector.broadcast %143 : vector<1x1x1xf32> to vector<1x1x9xf32>
      %145 = vector.broadcast %cst_39 : f32 to vector<1x1x9xf32>
      %146 = arith.select %142, %144, %145 : vector<1x1x9xi1>, vector<1x1x9xf32>
      %147 = arith.addf %140, %146 : vector<1x1x9xf32>
      %c0_40 = arith.constant 0 : index
      %c0_41 = arith.constant 0 : index
      %c0_42 = arith.constant 0 : index
      %148 = vector.load %arg6[%c0_40, %c0_41, %c0_42] : memref<1x1x9xf32, #tpu.memory_space<vmem>>, vector<1x1x9xf32>
      tpu.vector_store %arg6[%c0_40, %c0_41, %c0_42], %147 {strides = array<i32>} : memref<1x1x9xf32, #tpu.memory_space<vmem>>, vector<1x1x9xf32>,
    } else {
    }
    %c0 = arith.constant 0 : index
    %c0_1 = arith.constant 0 : index
    %c0_2 = arith.constant 0 : index
    %3 = vector.load %arg3[%c0, %c0_1, %c0_2] : memref<1x64x128xf32, #tpu.memory_space<vmem>>, vector<1x64x128xf32>
    %c0_3 = arith.constant 0 : index
    %c0_4 = arith.constant 0 : index
    %c0_5 = arith.constant 0 : index
    %4 = vector.load %arg4[%c0_3, %c0_4, %c0_5] : memref<1x64x128xbf16, #tpu.memory_space<vmem>>, vector<1x64x128xbf16>
    %5 = arith.extf %4 : vector<1x64x128xbf16> to vector<1x64x128xf32>
    %6 = tpu.iota {dimensions = array<i32: 2>} : vector<1x64x128xi32>
    %c3_i32 = arith.constant 3 : i32
    %7 = vector.broadcast %c3_i32 : i32 to vector<1x64x128xi32>
    %8 = arith.andi %6, %7 : vector<1x64x128xi32>
    %c3_i32_6 = arith.constant 3 : i32
    %9 = vector.broadcast %c3_i32_6 : i32 to vector<1x64x128xi32>
    %10 = arith.cmpi eq, %8, %9 : vector<1x64x128xi32>
    %11 = arith.subf %3, %5 : vector<1x64x128xf32>
    %cst = arith.constant 0.000000e+00 : f32
    %12 = vector.broadcast %cst : f32 to vector<1x64x128xf32>
    %13 = arith.select %10, %11, %12 : vector<1x64x128xi1>, vector<1x64x128xf32>
    %c0_7 = arith.constant 0 : index
    %c0_8 = arith.constant 0 : index
    %c0_9 = arith.constant 0 : index
    %14 = vector.load %arg7[%c0_7, %c0_8, %c0_9] : memref<1x64x128xf32, #tpu.memory_space<vmem>>, vector<1x64x128xf32>
    %15 = arith.mulf %13, %13 : vector<1x64x128xf32>
    %16 = arith.addf %14, %15 : vector<1x64x128xf32>
    %c0_10 = arith.constant 0 : index
    %c0_11 = arith.constant 0 : index
    %c0_12 = arith.constant 0 : index
    %17 = vector.load %arg7[%c0_10, %c0_11, %c0_12] : memref<1x64x128xf32, #tpu.memory_space<vmem>>, vector<1x64x128xf32>
    tpu.vector_store %arg7[%c0_10, %c0_11, %c0_12], %16 {strides = array<i32>} : memref<1x64x128xf32, #tpu.memory_space<vmem>>, vector<1x64x128xf32>,
    %c0_i32_13 = arith.constant 0 : i32
    %18 = arith.cmpi eq, %arg1, %c0_i32_13 : i32
    %19 = arith.extui %18 : i1 to i32
    %c0_i32_14 = arith.constant 0 : i32
    %20 = arith.cmpi ne, %19, %c0_i32_14 : i32
    scf.if %20 {
      %c0_15 = arith.constant 0 : index
      %c0_16 = arith.constant 0 : index
      %c0_17 = arith.constant 0 : index
      %21 = vector.load %arg7[%c0_15, %c0_16, %c0_17] : memref<1x64x128xf32, #tpu.memory_space<vmem>>, vector<1x64x128xf32>
      %22 = vector.shape_cast %21 : vector<1x64x128xf32> to vector<1x1x64x128xf32>
      %cst_18 = arith.constant dense<0.000000e+00> : vector<1xf32>
      %23 = vector.multi_reduction <add>, %22, %cst_18 [1, 2, 3] : vector<1x1x64x128xf32> to vector<1xf32>
      %24 = vector.shape_cast %23 : vector<1xf32> to vector<1x1x1x1xf32>
      %25 = vector.extract %24[0, 0, 0, 0] : f32 from vector<1x1x1x1xf32>
      %26 = vector.broadcast %25 : f32 to vector<1x1x1xf32>
      %c0_19 = arith.constant 0 : index
      %c0_20 = arith.constant 0 : index
      %c0_21 = arith.constant 0 : index
      %27 = vector.load %arg5[%c0_19, %c0_20, %c0_21] : memref<1x1x1xf32, #tpu.memory_space<vmem>>, vector<1x1x1xf32>
      tpu.vector_store %arg5[%c0_19, %c0_20, %c0_21], %26 {strides = array<i32>} : memref<1x1x1xf32, #tpu.memory_space<vmem>>, vector<1x1x1xf32>,
    } else {
    }
    return
  }
  func.func @transform_0(%arg0: i32, %arg1: i32) -> (i32, i32) {
    %c0_i32 = arith.constant 0 : i32
    %c0_i32_0 = arith.constant 0 : i32
    %c0_i32_1 = arith.constant 0 : i32
    return %c0_i32, %c0_i32_0 : i32, i32
  }
  func.func @transform_1(%arg0: i32, %arg1: i32) -> (i32, i32, i32) {
    %c1_i32 = arith.constant 1 : i32
    %0 = arith.muli %arg0, %c1_i32 : i32
    %1 = arith.addi %0, %arg1 : i32
    %c0_i32 = arith.constant 0 : i32
    %c0_i32_0 = arith.constant 0 : i32
    %c0_i32_1 = arith.constant 0 : i32
    return %c0_i32, %1, %c0_i32_0 : i32, i32, i32
  }
  func.func @transform_2(%arg0: i32, %arg1: i32) -> (i32, i32, i32) {
    %c1_i32 = arith.constant 1 : i32
    %0 = arith.muli %arg0, %c1_i32 : i32
    %1 = arith.addi %0, %arg1 : i32
    %c0_i32 = arith.constant 0 : i32
    %c0_i32_0 = arith.constant 0 : i32
    %c0_i32_1 = arith.constant 0 : i32
    return %c0_i32, %1, %c0_i32_0 : i32, i32, i32
  }
  func.func @transform_3(%arg0: i32, %arg1: i32) -> (i32, i32, i32) {
    %c0_i32 = arith.constant 0 : i32
    %c0_i32_0 = arith.constant 0 : i32
    %c0_i32_1 = arith.constant 0 : i32
    return %arg0, %c0_i32, %c0_i32_0 : i32, i32, i32
  }
  func.func @transform_4(%arg0: i32, %arg1: i32) -> (i32, i32, i32) {
    %c0_i32 = arith.constant 0 : i32
    %c0_i32_0 = arith.constant 0 : i32
    %c0_i32_1 = arith.constant 0 : i32
    return %arg0, %c0_i32, %c0_i32_0 : i32, i32, i32
  }
}

</mosaic_0001>

<llo_original>
// kernel: tpu_custom_call.1
$region0: #{tpu_custom_call.1}
  #allocation0 [shape = 'u32[]', space=smem, size = 0x4, offset = 0x4, fixed_abs, tag = 'smem constant byte address 0x4 - core index']
  #allocation1 [shape = 'u32[144,128]{1,0:T(1,128)}', space=vmem, size = 0x12000, scoped, tag = 'internal scratch']
  #allocation2 [shape = 'f32[1,64,128]{2,1,0:T(8,128)}', space=vmem, size = 0x8000, scoped, tag = 'scratch operand']
  %s0 = inlined_call_operand.hbm [shape: f32[1,4], index: 0, kind: input, shape index: {}]
  %s1 = inlined_call_operand.hbm [shape: f32[1,64,128], index: 1, kind: input, shape index: {}]
  %s2 = inlined_call_operand.hbm [shape: bf16[1,64,128], index: 2, kind: input, shape index: {}]
  %s3 = inlined_call_operand.hbm [shape: f32[1,1,1], index: 3, kind: output, shape index: {0}]
  %s4 = inlined_call_operand.hbm [shape: f32[1,1,9], index: 4, kind: output, shape index: {1}]
  %5 = xla_tuple %s3, %s4
  %s6 = sld [smem:[#allocation0]]
  $region50: #{tpu_custom_call.1} parent=0
    _
  %s8 = ssub.s32 1, %s6
  %s9 = scalar_select 0, %s8, %s6
  $region1: #{tpu_custom_call.1} parent=0
    #allocation3 [shape = 'u8[512]{0}', space=vmem, size = 0x400, scoped, tag = 'input window, operand 0, single buffered']
    #allocation4 [shape = 's32[1]{0}', space=sflag, size = 0x4, scoped, tag = 'scoped memory for tpu_custom_call.1']
    #allocation5 [shape = 's32[1]{0}', space=sflag, size = 0x4, scoped, tag = 'scoped memory for tpu_custom_call.1']
    #allocation6 [shape = 'u8[32768]{0}', space=vmem, size = 0x8000, scoped, tag = 'input window, operand 1, single buffered']
    #allocation7 [shape = 's32[1]{0}', space=sflag, size = 0x4, scoped, tag = 'scoped memory for tpu_custom_call.1']
    #allocation8 [shape = 'u8[16384]{0}', space=vmem, size = 0x4000, scoped, tag = 'input window, operand 2, single buffered']
    #allocation9 [shape = 'u8[512]{0}', space=vmem, size = 0x400, scoped, tag = 'output window, operand 0, single buffered']
    #allocation10 [shape = 'u8[512]{0}', space=vmem, size = 0x400, scoped, tag = 'output window, operand 1, single buffered']
    #allocation11 [shape = 's32[1]{0}', space=sflag, size = 0x4, scoped, tag = 'scoped memory for tpu_custom_call.1']
    %10 = vsyncpa [#allocation4], 0
    %11 = vsyncpa [#allocation7], 0
    %12 = vsyncpa [#allocation5], 0
    %13 = vsyncpa [#allocation11], 0
    // Predicated region
    $region2: #{tpu_custom_call.1} parent=1 // pred_check
      _
    $region3: #{tpu_custom_call.1} parent=1 // pred_check_branch
      %15 = sbr.rel (0) target = $region5
    $region4: #{tpu_custom_call.1} parent=1 // pred_region
      %s17 = ssub.s32 16, 16
      %18 = vsyncadd [#allocation4], %s17
      %s20 = sshll.u32 [#allocation3], 4
      %s21 = int_to_ptr.vmem [resolvable:$true] %s20
      %23 = dma.hbm_to_vmem [thread:$0]  %s0, 16, %s21, [#allocation4]
    $region5: #{tpu_custom_call.1} parent=1 // pred_fallthru
      _
    // Predicated region
    $region6: #{tpu_custom_call.1} parent=1 // pred_check
      _
    $region7: #{tpu_custom_call.1} parent=1 // pred_check_branch
      %25 = sbr.rel (0) target = $region9
    $region8: #{tpu_custom_call.1} parent=1 // pred_region
      %s26 = sadd.s32 0, 0
      %s27 = smul.u32 8, %s26
      %s29 = ssub.s32 1024, 1024
      %30 = vsyncadd [#allocation7], %s29
      %s31 = smul.addr %s27, 128
      %s32 = scalar_lea.hbm %s1, %s31
      %s33 = sshll.u32 [#allocation6], 4
      %s34 = int_to_ptr.vmem [resolvable:$true] %s33
      %39 = dma.hbm_to_vmem [thread:$0]  %s32, 1024, %s34, [#allocation7], 128, 128, 8
    $region9: #{tpu_custom_call.1} parent=1 // pred_fallthru
      _
    // Predicated region
    $region10: #{tpu_custom_call.1} parent=1 // pred_check
      _
    $region11: #{tpu_custom_call.1} parent=1 // pred_check_branch
      %41 = sbr.rel (0) target = $region13
    $region12: #{tpu_custom_call.1} parent=1 // pred_region
      %s42 = sadd.s32 0, 0
      %s43 = smul.u32 8, %s42
      %s45 = ssub.s32 512, 512
      %46 = vsyncadd [#allocation7], %s45
      %s47 = smul.addr %s43, 64
      %s48 = scalar_lea.hbm %s2, %s47
      %s49 = sshll.u32 [#allocation8], 4
      %s50 = int_to_ptr.vmem [resolvable:$true] %s49
      %55 = dma.hbm_to_vmem [thread:$0]  %s48, 512, %s50, [#allocation7], 64, 64, 4
    $region13: #{tpu_custom_call.1} parent=1 // pred_fallthru
      _
    // Predicated region
    $region14: #{tpu_custom_call.1} parent=1 // pred_check
      _
    $region15: #{tpu_custom_call.1} parent=1 // pred_check_branch
      %57 = sbr.rel (0) target = $region17
    $region16: #{tpu_custom_call.1} parent=1 // pred_region
      %58 = dma.done [#allocation4], 16
    $region17: #{tpu_custom_call.1} parent=1 // pred_fallthru
      _
    // Predicated region
    $region18: #{tpu_custom_call.1} parent=1 // pred_check
      _
    $region19: #{tpu_custom_call.1} parent=1 // pred_check_branch
      %60 = sbr.rel (0) target = $region21
    $region20: #{tpu_custom_call.1} parent=1 // pred_region
      %61 = dma.done [#allocation7], 1024
    $region21: #{tpu_custom_call.1} parent=1 // pred_fallthru
      _
    // Predicated region
    $region22: #{tpu_custom_call.1} parent=1 // pred_check
      _
    $region23: #{tpu_custom_call.1} parent=1 // pred_check_branch
      %63 = sbr.rel (0) target = $region25
    $region24: #{tpu_custom_call.1} parent=1 // pred_region
      %64 = dma.done [#allocation7], 512
    $region25: #{tpu_custom_call.1} parent=1 // pred_fallthru
      _
    %s65 = sadd.s32 0, 0
    %s66 = smul.u32 8, %s65
    %s67 = sadd.s32 0, 0
    %s68 = smul.u32 8, %s67
    %p69 = scmp.eq.s32.totalorder 0, 0
    // Predicated region
    $region26: #{tpu_custom_call.1} parent=1 // pred_check
      %p70 = pneg %p69
    $region27: #{tpu_custom_call.1} parent=1 // pred_check_branch
      %72 = sbr.rel (%p70) target = $region29
    $region28: #{tpu_custom_call.1} parent=1 // pred_region
      %73 = vst [vmem:[#allocation2] sm:$0xff] 0.0
      %74 = vst [vmem:[#allocation2 + $0x8] sm:$0xff] 0.0
      %75 = vst [vmem:[#allocation2 + $0x10] sm:$0xff] 0.0
      %76 = vst [vmem:[#allocation2 + $0x18] sm:$0xff] 0.0
      %77 = vst [vmem:[#allocation2 + $0x20] sm:$0xff] 0.0
      %78 = vst [vmem:[#allocation2 + $0x28] sm:$0xff] 0.0
      %79 = vst [vmem:[#allocation2 + $0x30] sm:$0xff] 0.0
      %80 = vst [vmem:[#allocation2 + $0x38] sm:$0xff] 0.0
      %v81 = vld [vmem:[#allocation3] sm:$0x1]
      %v82 = vmul.f32 %v81, %v81
      %vm83 = vcmask 24576
      %v84 = vsel %vm83, %v82, 0.0
      %85 = vadd.xlane.f32.xlu0 %v84
      %v86 = vpop.xlane.xlu0 %85
      %v87 = vadd.f32 %v86, 1e-08
      %v88 = vrsqrt.pop %v87
      %v89 = vmul.f32 %v87, %v88
      %vm90 = vcmp.eq.f32.partialorder %v87, inf
      %v91 = vsel %vm90, %v87, %v89
      %vm92 = vcmp.eq.f32.partialorder %v87, 0.0
      %v93 = vand.u32 %v87, 2147483648
      %v94 = vsel %vm92, %v93, %v91
      %v95 = vrcp.pop %v94
      %v96 = vmul.f32 %v81, %v95
      %v97 = vmul.f32 %v96, %v96
      %v98 = vsel %vm83, %v97, 0.0
      %99 = vadd.xlane.f32.xlu0 %v98
      %v100 = vpop.xlane.xlu0 %99
      %v101 = vrcp.pop %v100
      %v102 = vmul.f32 2.0, %v101
      %104 = vrot.lane.b32.xlu0 %v97, 127
      %v105 = vpop.permute.xlu0 %104
      %v107 = vadd.f32 %v97, %v105
      %v109 = vlaneseq
      %v110 = vshrl.u32 %v109, 7
      %v111 = vsub.s32 0, %v110
      %v112 = vrot.slane %v107, %v111
      %113 = vrot.lane.b32.xlu0 %v112, 126
      %v114 = vpop.permute.xlu0 %113
      %v116 = vmul.f32 %v102, %v114
      %v117 = vsub.f32 1.0, %v116
      %119 = vrot.lane.b32.xlu0 %v96, 127
      %v120 = vpop.permute.xlu0 %119
      %v122 = vmul.f32 %v96, %v120
      %123 = vrot.lane.b32.xlu0 %v96, 3
      %v124 = vpop.permute.xlu0 %123
      %v126 = vmul.f32 %v96, %v124
      %128 = vrot.lane.b32.xlu0 %v126, 126
      %v129 = vpop.permute.xlu0 %128
      %v131 = vsub.f32 %v122, %v129
      %v133 = vlaneseq
      %v134 = vshrl.u32 %v133, 7
      %v135 = vsub.s32 0, %v134
      %v136 = vrot.slane %v131, %v135
      %137 = vrot.lane.b32.xlu0 %v136, 127
      %v138 = vpop.permute.xlu0 %137
      %v140 = vmul.f32 %v102, %v138
      %141 = vrot.lane.b32.xlu0 %v96, 126
      %v142 = vpop.permute.xlu0 %141
      %v144 = vmul.f32 %v96, %v142
      %145 = vrot.lane.b32.xlu0 %v96, 2
      %v146 = vpop.permute.xlu0 %145
      %v148 = vmul.f32 %v96, %v146
      %150 = vrot.lane.b32.xlu0 %v148, 127
      %v151 = vpop.permute.xlu0 %150
      %v153 = vadd.f32 %v144, %v151
      %v155 = vlaneseq
      %v156 = vshrl.u32 %v155, 7
      %v157 = vsub.s32 0, %v156
      %v158 = vrot.slane %v153, %v157
      %159 = vrot.lane.b32.xlu0 %v158, 127
      %v160 = vpop.permute.xlu0 %159
      %v162 = vmul.f32 %v102, %v160
      %v163 = vadd.f32 %v122, %v129
      %v165 = vlaneseq
      %v166 = vshrl.u32 %v165, 7
      %v167 = vsub.s32 0, %v166
      %v168 = vrot.slane %v163, %v167
      %169 = vrot.lane.b32.xlu0 %v168, 127
      %v170 = vpop.permute.xlu0 %169
      %v172 = vmul.f32 %v102, %v170
      %173 = vrot.lane.b32.xlu0 %v97, 126
      %v174 = vpop.permute.xlu0 %173
      %v176 = vadd.f32 %v97, %v174
      %v178 = vlaneseq
      %v179 = vshrl.u32 %v178, 7
      %v180 = vsub.s32 0, %v179
      %v181 = vrot.slane %v176, %v180
      %182 = vrot.lane.b32.xlu0 %v181, 127
      %v183 = vpop.permute.xlu0 %182
      %v185 = vmul.f32 %v102, %v183
      %v186 = vsub.f32 1.0, %v185
      %187 = vrot.lane.b32.xlu0 %v96, 1
      %v188 = vpop.permute.xlu0 %187
      %v190 = vmul.f32 %v96, %v188
      %192 = vrot.lane.b32.xlu0 %v190, 1
      %v193 = vpop.permute.xlu0 %192
      %v195 = vsub.f32 %v122, %v193
      %v197 = vlaneseq
      %v198 = vshrl.u32 %v197, 7
      %v199 = vsub.s32 0, %v198
      %v200 = vrot.slane %v195, %v199
      %201 = vrot.lane.b32.xlu0 %v200, 126
      %v202 = vpop.permute.xlu0 %201
      %v204 = vmul.f32 %v102, %v202
      %v205 = vsub.f32 %v144, %v151
      %v207 = vlaneseq
      %v208 = vshrl.u32 %v207, 7
      %v209 = vsub.s32 0, %v208
      %v210 = vrot.slane %v205, %v209
      %211 = vrot.lane.b32.xlu0 %v210, 127
      %v212 = vpop.permute.xlu0 %211
      %v214 = vmul.f32 %v102, %v212
      %v215 = vadd.f32 %v122, %v193
      %v217 = vlaneseq
      %v218 = vshrl.u32 %v217, 7
      %v219 = vsub.s32 0, %v218
      %v220 = vrot.slane %v215, %v219
      %221 = vrot.lane.b32.xlu0 %v220, 126
      %v222 = vpop.permute.xlu0 %221
      %v224 = vmul.f32 %v102, %v222
      %225 = vrot.lane.b32.xlu0 %v112, 127
      %v226 = vpop.permute.xlu0 %225
      %v228 = vmul.f32 %v102, %v226
      %v229 = vsub.f32 1.0, %v228
      %v230 = vlaneseq
      %v231 = vand.u32 %v230, 127
      %vm232 = vcmp.eq.s32.totalorder %v231, 0
      %234 = vset.pattern.permute.xlu0 0
      %235 = vperm.xlu0 %234, %v117
      %v236 = vpop.permute.xlu0 %235
      %v238 = vsel %vm232, %v236, 0.0
      %v239 = vadd.f32 %v238, 0.0
      %vm240 = vcmp.eq.s32.totalorder %v231, 1
      %242 = vset.pattern.permute.xlu0 0
      %243 = vperm.xlu0 %242, %v140
      %v244 = vpop.permute.xlu0 %243
      %v246 = vsel %vm240, %v244, 0.0
      %v247 = vadd.f32 %v239, %v246
      %vm248 = vcmp.eq.s32.totalorder %v231, 2
      %250 = vset.pattern.permute.xlu0 0
      %251 = vperm.xlu0 %250, %v162
      %v252 = vpop.permute.xlu0 %251
      %v254 = vsel %vm248, %v252, 0.0
      %v255 = vadd.f32 %v247, %v254
      %vm256 = vcmp.eq.s32.totalorder %v231, 3
      %258 = vset.pattern.permute.xlu0 0
      %259 = vperm.xlu0 %258, %v172
      %v260 = vpop.permute.xlu0 %259
      %v262 = vsel %vm256, %v260, 0.0
      %v263 = vadd.f32 %v255, %v262
      %vm264 = vcmp.eq.s32.totalorder %v231, 4
      %266 = vset.pattern.permute.xlu0 0
      %267 = vperm.xlu0 %266, %v186
      %v268 = vpop.permute.xlu0 %267
      %v270 = vsel %vm264, %v268, 0.0
      %v271 = vadd.f32 %v263, %v270
      %vm272 = vcmp.eq.s32.totalorder %v231, 5
      %274 = vset.pattern.permute.xlu0 0
      %275 = vperm.xlu0 %274, %v204
      %v276 = vpop.permute.xlu0 %275
      %v278 = vsel %vm272, %v276, 0.0
      %v279 = vadd.f32 %v271, %v278
      %vm280 = vcmp.eq.s32.totalorder %v231, 6
      %282 = vset.pattern.permute.xlu0 0
      %283 = vperm.xlu0 %282, %v214
      %v284 = vpop.permute.xlu0 %283
      %v286 = vsel %vm280, %v284, 0.0
      %v287 = vadd.f32 %v279, %v286
      %vm288 = vcmp.eq.s32.totalorder %v231, 7
      %290 = vset.pattern.permute.xlu0 0
      %291 = vperm.xlu0 %290, %v224
      %v292 = vpop.permute.xlu0 %291
      %v294 = vsel %vm288, %v292, 0.0
      %v295 = vadd.f32 %v287, %v294
      %vm296 = vcmp.eq.s32.totalorder %v231, 8
      %298 = vset.pattern.permute.xlu0 0
      %299 = vperm.xlu0 %298, %v229
      %v300 = vpop.permute.xlu0 %299
      %v302 = vsel %vm296, %v300, 0.0
      %v303 = vadd.f32 %v295, %v302
      %vm304 = vcmask 65536
      %305 = vst.msk [vmem:[#allocation10] sm:$0x1] %vm304, %v303
    $region29: #{tpu_custom_call.1} parent=1 // pred_fallthru
      _
    %v306 = vld [vmem:[#allocation6] sm:$0xff]
    %v307 = vld [vmem:[#allocation6 + $0x8] sm:$0xff]
    %v308 = vld [vmem:[#allocation6 + $0x10] sm:$0xff]
    %v309 = vld [vmem:[#allocation6 + $0x18] sm:$0xff]
    %v310 = vld [vmem:[#allocation6 + $0x20] sm:$0xff]
    %v311 = vld [vmem:[#allocation6 + $0x28] sm:$0xff]
    %v312 = vld [vmem:[#allocation6 + $0x30] sm:$0xff]
    %v313 = vld [vmem:[#allocation6 + $0x38] sm:$0xff]
    %v314 = vld [vmem:[#allocation8] sm:$0xf]
    %v315 = vld [vmem:[#allocation8 + $0x4] sm:$0xf]
    %v316 = vld [vmem:[#allocation8 + $0x8] sm:$0xf]
    %v317 = vld [vmem:[#allocation8 + $0xc] sm:$0xf]
    %v318 = vld [vmem:[#allocation8 + $0x10] sm:$0xf]
    %v319 = vld [vmem:[#allocation8 + $0x14] sm:$0xf]
    %v320 = vld [vmem:[#allocation8 + $0x18] sm:$0xf]
    %v321 = vld [vmem:[#allocation8 + $0x1c] sm:$0xf]
    %v322 = vunpack.c.l.bf16 %v314
    %v323 = vunpack.c.l.bf16 %v315
    %v324 = vunpack.c.l.bf16 %v316
    %v325 = vunpack.c.l.bf16 %v317
    %v326 = vunpack.c.l.bf16 %v318
    %v327 = vunpack.c.l.bf16 %v319
    %v328 = vunpack.c.l.bf16 %v320
    %v329 = vunpack.c.l.bf16 %v321
    %v330 = vlaneseq
    %v331 = vand.u32 %v330, 127
    %v332 = vand.u32 %v331, 3
    %vm333 = vcmp.eq.s32.totalorder %v332, 3
    %v334 = vsub.f32 %v306, %v322
    %v335 = vsub.f32 %v307, %v323
    %v336 = vsub.f32 %v308, %v324
    %v337 = vsub.f32 %v309, %v325
    %v338 = vsub.f32 %v310, %v326
    %v339 = vsub.f32 %v311, %v327
    %v340 = vsub.f32 %v312, %v328
    %v341 = vsub.f32 %v313, %v329
    %v342 = vsel %vm333, %v334, 0.0
    %v343 = vsel %vm333, %v335, 0.0
    %v344 = vsel %vm333, %v336, 0.0
    %v345 = vsel %vm333, %v337, 0.0
    %v346 = vsel %vm333, %v338, 0.0
    %v347 = vsel %vm333, %v339, 0.0
    %v348 = vsel %vm333, %v340, 0.0
    %v349 = vsel %vm333, %v341, 0.0
    %v350 = vld [vmem:[#allocation2] sm:$0xff]
    %v351 = vld [vmem:[#allocation2 + $0x8] sm:$0xff]
    %v352 = vld [vmem:[#allocation2 + $0x10] sm:$0xff]
    %v353 = vld [vmem:[#allocation2 + $0x18] sm:$0xff]
    %v354 = vld [vmem:[#allocation2 + $0x20] sm:$0xff]
    %v355 = vld [vmem:[#allocation2 + $0x28] sm:$0xff]
    %v356 = vld [vmem:[#allocation2 + $0x30] sm:$0xff]
    %v357 = vld [vmem:[#allocation2 + $0x38] sm:$0xff]
    %v358 = vmul.f32 %v342, %v342
    %v359 = vmul.f32 %v343, %v343
    %v360 = vmul.f32 %v344, %v344
    %v361 = vmul.f32 %v345, %v345
    %v362 = vmul.f32 %v346, %v346
    %v363 = vmul.f32 %v347, %v347
    %v364 = vmul.f32 %v348, %v348
    %v365 = vmul.f32 %v349, %v349
    %v366 = vadd.f32 %v350, %v358
    %v367 = vadd.f32 %v351, %v359
    %v368 = vadd.f32 %v352, %v360
    %v369 = vadd.f32 %v353, %v361
    %v370 = vadd.f32 %v354, %v362
    %v371 = vadd.f32 %v355, %v363
    %v372 = vadd.f32 %v356, %v364
    %v373 = vadd.f32 %v357, %v365
    %374 = vst [vmem:[#allocation2] sm:$0xff] %v366
    %375 = vst [vmem:[#allocation2 + $0x8] sm:$0xff] %v367
    %376 = vst [vmem:[#allocation2 + $0x10] sm:$0xff] %v368
    %377 = vst [vmem:[#allocation2 + $0x18] sm:$0xff] %v369
    %378 = vst [vmem:[#allocation2 + $0x20] sm:$0xff] %v370
    %379 = vst [vmem:[#allocation2 + $0x28] sm:$0xff] %v371
    %380 = vst [vmem:[#allocation2 + $0x30] sm:$0xff] %v372
    %381 = vst [vmem:[#allocation2 + $0x38] sm:$0xff] %v373
    // Predicated region
    $region30: #{tpu_custom_call.1} parent=1 // pred_check
      %p382 = pneg %p69
    $region31: #{tpu_custom_call.1} parent=1 // pred_check_branch
      %384 = sbr.rel (%p382) target = $region33
    $region32: #{tpu_custom_call.1} parent=1 // pred_region
      %v385 = vld [vmem:[#allocation2] sm:$0xff]
      %v386 = vld [vmem:[#allocation2 + $0x8] sm:$0xff]
      %v387 = vld [vmem:[#allocation2 + $0x10] sm:$0xff]
      %v388 = vld [vmem:[#allocation2 + $0x18] sm:$0xff]
      %v389 = vld [vmem:[#allocation2 + $0x20] sm:$0xff]
      %v390 = vld [vmem:[#allocation2 + $0x28] sm:$0xff]
      %v391 = vld [vmem:[#allocation2 + $0x30] sm:$0xff]
      %v392 = vld [vmem:[#allocation2 + $0x38] sm:$0xff]
      %v393 = vadd.f32 %v385, %v386
      %v394 = vadd.f32 %v393, %v387
      %v395 = vadd.f32 %v394, %v388
      %v396 = vadd.f32 %v395, %v389
      %v397 = vadd.f32 %v396, %v390
      %v398 = vadd.f32 %v397, %v391
      %v399 = vadd.f32 %v398, %v392
      %400 = vadd.xlane.f32.xlu0 %v399
      %v401 = vpop.xlane.xlu0 %400
      %v402 = vrot.slane %v401, 4
      %v403 = vadd.f32 %v401, %v402
      %v404 = vrot.slane %v403, 2
      %v405 = vadd.f32 %v403, %v404
      %v406 = vrot.slane %v405, 1
      %v407 = vadd.f32 %v405, %v406
      %s408 = vtos %v407
      %v409 = vstv %s408
      %vm410 = vcmask 0
      %411 = vst.msk [vmem:[#allocation9] sm:$0x1] %vm410, %v409
    $region33: #{tpu_custom_call.1} parent=1 // pred_fallthru
      _
    // Predicated region
    $region34: #{tpu_custom_call.1} parent=1 // pred_check
      _
    $region35: #{tpu_custom_call.1} parent=1 // pred_check_branch
      %413 = sbr.rel (0) target = $region37
    $region36: #{tpu_custom_call.1} parent=1 // pred_region
      %s415 = ssub.s32 16, 16
      %416 = vsyncadd [#allocation5], %s415
      %s418 = sshll.u32 [#allocation9], 4
      %s419 = int_to_ptr.vmem [resolvable:$true] %s418
      %421 = dma.vmem_to_hbm [thread:$0]  %s419, 16, %s3, [#allocation5]
    $region37: #{tpu_custom_call.1} parent=1 // pred_fallthru
      _
    // Predicated region
    $region38: #{tpu_custom_call.1} parent=1 // pred_check
      _
    $region39: #{tpu_custom_call.1} parent=1 // pred_check_branch
      %423 = sbr.rel (0) target = $region41
    $region40: #{tpu_custom_call.1} parent=1 // pred_region
      %s425 = ssub.s32 16, 16
      %426 = vsyncadd [#allocation11], %s425
      %s428 = sshll.u32 [#allocation10], 4
      %s429 = int_to_ptr.vmem [resolvable:$true] %s428
      %431 = dma.vmem_to_hbm [thread:$0]  %s429, 16, %s4, [#allocation11]
    $region41: #{tpu_custom_call.1} parent=1 // pred_fallthru
      _
    // Predicated region
    $region42: #{tpu_custom_call.1} parent=1 // pred_check
      _
    $region43: #{tpu_custom_call.1} parent=1 // pred_check_branch
      %433 = sbr.rel (0) target = $region45
    $region44: #{tpu_custom_call.1} parent=1 // pred_region
      %434 = dma.done [#allocation5], 16
    $region45: #{tpu_custom_call.1} parent=1 // pred_fallthru
      _
    // Predicated region
    $region46: #{tpu_custom_call.1} parent=1 // pred_check
      _
    $region47: #{tpu_custom_call.1} parent=1 // pred_check_branch
      %436 = sbr.rel (0) target = $region49
    $region48: #{tpu_custom_call.1} parent=1 // pred_region
      %437 = dma.done [#allocation11], 16
    $region49: #{tpu_custom_call.1} parent=1 // pred_fallthru
      _
    %438 = vsyncpa [#allocation4], 1
    %439 = vsyncpa [#allocation7], 1
    %440 = vsyncpa [#allocation5], 1
    %441 = vsyncpa [#allocation11], 1

</llo_original>
